<compile_context>
chip_gen: v5e
topology: v5e:2x2
jax: 0.10.0
libtpu: 0.0.40
codegen_flags: <defaults>
</compile_context>

<pallas_src>
import functools
import math

import jax
import jax.numpy as jnp
from jax.experimental import pallas as pl
from jax.experimental.pallas import tpu as pltpu


def _layernorm_kernel(x_ref, w_ref, b_ref, o_ref, *, eps, d_valid, unbiased_denom):
    # x_ref: (TR, D_pad) tile of rows; w_ref / b_ref: (1, D_pad) resident params.
    x = x_ref[...].astype(jnp.float32)
    d_pad = x.shape[-1]

    if d_pad != d_valid:
        # Feature axis was zero-padded to a multiple of 128 in the wrapper:
        # mask the padded lanes out of the statistics (cheap VPU selects).
        lane = jax.lax.broadcasted_iota(jnp.int32, x.shape, dimension=1)
        valid = lane < d_valid
        xs = jnp.where(valid, x, 0.0)
    else:
        valid = None
        xs = x

    mean = jnp.sum(xs, axis=-1, keepdims=True) * (1.0 / d_valid)
    diff = x - mean
    if valid is not None:
        diff = jnp.where(valid, diff, 0.0)

    # torch's x.std(-1) is the UNBIASED std (divide by D-1); denom clamped >=1.
    var = jnp.sum(diff * diff, axis=-1, keepdims=True) * (1.0 / unbiased_denom)
    std = jnp.sqrt(var)

    # Exact reciprocal (approx=False lowers to an exact divide/Newton path, NOT
    # the EUP vrcp slot). One per row; the kernel is HBM-bound so this choice
    # has negligible wall-clock impact -- kept exact for bit-tight numerics.
    inv = pl.reciprocal(std + eps, approx=False)

    # Padded lanes: diff == 0 and weight/bias padded with 0 -> padded output
    # columns are exactly 0 and are sliced off by the wrapper.
    y = w_ref[...] * (diff * inv) + b_ref[...]
    o_ref[...] = y.astype(o_ref.dtype)


def _pick_tile_rows(rows, d_pad, itemsize, *, target_rows, vmem_limit_bytes):
    """Row-tile size: as large as the VMEM budget allows, megacore-friendly."""
    # Sublane multiple: 16 for sub-32-bit dtypes (bf16/fp16 packing), else 8.
    sub = 16 if itemsize < 4 else 8
    # Per-row VMEM: 2 input + 2 output pipeline buffers in x.dtype plus ~4
    # full-tile f32 intermediates inside the kernel body. Keep <=50% of the
    # scoped VMEM limit as headroom (this also caps tiles for v7x's smaller
    # 64 MiB physical / 32 MiB scoped VMEM when D is large).
    per_row_bytes = (4 * itemsize + 4 * 4) * d_pad
    vmem_cap_rows = max(sub, (vmem_limit_bytes // 2) // per_row_bytes)

    tr = min(target_rows, vmem_cap_rows, rows)
    if rows > target_rows:
        # Guarantee >= 2 grid steps (split ~in half if needed) so both v7x
        # TensorCores get work under dimension_semantics=("parallel",).
        tr = min(tr, -(-rows // 2))
    if tr < rows:
        tr = max(sub, (tr // sub) * sub)
    return tr


def layer_norm(x, weight, bias, *, eps=1e-6, target_block_rows=1024,
               vmem_limit_bytes=32 * 1024 * 1024):
    """LayerNorm over the last axis of x, matching the PoolFormer LayerNorm module.

    x:      (..., D) activations (any leading dims; they are flattened to rows).
            Feeding bf16 activations halves HBM traffic (stats stay in f32).
    weight: (D,) scale, bias: (D,) shift.
    """
    orig_shape = x.shape
    d = orig_shape[-1]
    rows = math.prod(orig_shape[:-1]) if len(orig_shape) > 1 else 1

    # Lane-dense layout: pad the feature axis up to a multiple of 128 so the
    # output store is an unmasked full-lane vst (biggest measured layout lever).
    d_pad = max(128, ((d + 127) // 128) * 128)

    x2 = x.reshape(rows, d)
    w2 = weight.reshape(1, d).astype(jnp.float32)
    b2 = bias.reshape(1, d).astype(jnp.float32)
    if d_pad != d:
        pad = d_pad - d
        x2 = jnp.pad(x2, ((0, 0), (0, pad)))
        w2 = jnp.pad(w2, ((0, 0), (0, pad)))
        b2 = jnp.pad(b2, ((0, 0), (0, pad)))

    itemsize = jnp.dtype(x.dtype).itemsize
    tr = _pick_tile_rows(rows, d_pad, itemsize,
                         target_rows=target_block_rows,
                         vmem_limit_bytes=vmem_limit_bytes)
    grid = (pl.cdiv(rows, tr),)
    # Ragged last tile is fine: rows are independent, padded garbage rows never
    # contaminate valid rows and their stores are masked out by Pallas.

    # Advisory cost hint so XLA can overlap this mem-bound call with neighbors.
    cost = pl.CostEstimate(
        flops=6 * rows * d,
        transcendentals=2 * rows,
        bytes_accessed=2 * rows * d * itemsize + 2 * d * 4,
    )

    out = pl.pallas_call(
        functools.partial(_layernorm_kernel, eps=eps, d_valid=d,
                          unbiased_denom=max(d - 1, 1)),
        out_shape=jax.ShapeDtypeStruct((rows, d_pad), x.dtype),
        grid=grid,
        in_specs=[
            pl.BlockSpec((tr, d_pad), lambda i: (i, 0)),   # activations: row tile, full D (lane-dense)
            pl.BlockSpec((1, d_pad), lambda i: (0, 0)),    # weight: resident
            pl.BlockSpec((1, d_pad), lambda i: (0, 0)),    # bias: resident
        ],
        out_specs=pl.BlockSpec((tr, d_pad), lambda i: (i, 0)),
        compiler_params=pltpu.CompilerParams(
            dimension_semantics=("parallel",),   # megacore sharding on v7x
            # v5e's default scoped VMEM is only 16 MiB; 32 MiB lets the larger
            # row tiles double-buffer there while staying inside v7x's budget.
            vmem_limit_bytes=vmem_limit_bytes,
        ),
        cost_estimate=cost,
    )(x2, w2, b2)

    if d_pad != d:
        out = out[:, :d]
    return out.reshape(orig_shape)


def _reference(x, weight, bias, eps=1e-6):
    d = x.shape[-1]
    xf = x.astype(jnp.float32)
    mean = jnp.mean(xf, axis=-1, keepdims=True)
    var = jnp.sum((xf - mean) ** 2, axis=-1, keepdims=True) / max(d - 1, 1)
    return (weight.astype(jnp.float32) * (xf - mean) / (jnp.sqrt(var) + eps)
            + bias.astype(jnp.float32))


if __name__ == "__main__":
    key = jax.random.PRNGKey(0)

    # Test 1: lane-dense D=128, f32 (matches PoolFormer (B, N, D) activations).
    k1, k2, k3, key = jax.random.split(key, 4)
    B, N, D = 2, 64, 128
    x = jax.random.normal(k1, (B, N, D), jnp.float32)
    weight = 1.0 + 0.1 * jax.random.normal(k2, (D,), jnp.float32)
    bias = 0.1 * jax.random.normal(k3, (D,), jnp.float32)

    out = layer_norm(x, weight, bias)
    jax.block_until_ready(out)
    ref = _reference(x, weight, bias)
    assert out.shape == x.shape
    assert bool(jnp.allclose(out, ref, atol=1e-5, rtol=1e-5))

    # Test 2: D=96 (not a multiple of 128, exercises the padded lane-dense path)
    # with ragged rows, f32.
    k1, k2, k3, key = jax.random.split(key, 4)
    B2, N2, D2 = 2, 33, 96
    x2 = jax.random.normal(k1, (B2, N2, D2), jnp.float32)
    w2 = 1.0 + 0.1 * jax.random.normal(k2, (D2,), jnp.float32)
    b2 = 0.1 * jax.random.normal(k3, (D2,), jnp.float32)

    out2 = layer_norm(x2, w2, b2)
    jax.block_until_ready(out2)
    ref2 = _reference(x2, w2, b2)
    assert out2.shape == x2.shape
    assert bool(jnp.allclose(out2, ref2, atol=1e-5, rtol=1e-5))

    # Test 3: bf16 activations (halved HBM traffic path), f32 stats inside.
    xb = x.astype(jnp.bfloat16)
    outb = layer_norm(xb, weight, bias)
    jax.block_until_ready(outb)
    assert outb.dtype == jnp.bfloat16
    assert bool(jnp.allclose(outb.astype(jnp.float32), ref, atol=3e-2, rtol=3e-2))

    print("KERNEL_OK")
</pallas_src>

<mosaic_0001>
module attributes {stable_mosaic.version = 11 : i64} {
  func.func @_layernorm_kernel(%arg0: i32, %arg1: memref<128x128xf32, #tpu.memory_space<vmem>>, %arg2: memref<1x128xf32, #tpu.memory_space<vmem>>, %arg3: memref<1x128xf32, #tpu.memory_space<vmem>>, %arg4: memref<128x128xf32, #tpu.memory_space<vmem>>) attributes {dimension_semantics = [#tpu.dimension_semantics<parallel>], iteration_bounds = array<i64: 1>, scalar_prefetch = 0 : i64, scratch_operands = 0 : i64, tpu.core_type = #tpu.core_type<tc>, window_params = [{transform_indices = @transform_0, window_bounds = array<i64: 128, 128>}, {pipeline_mode = #tpu.pipeline_mode<synchronous>, transform_indices = @transform_1, window_bounds = array<i64: 1, 128>}, {pipeline_mode = #tpu.pipeline_mode<synchronous>, transform_indices = @transform_2, window_bounds = array<i64: 1, 128>}, {transform_indices = @transform_3, window_bounds = array<i64: 128, 128>}]} {
    %c0 = arith.constant 0 : index
    %c0_0 = arith.constant 0 : index
    %0 = vector.load %arg1[%c0, %c0_0] : memref<128x128xf32, #tpu.memory_space<vmem>>, vector<128x128xf32>
    %cst = arith.constant dense<0.000000e+00> : vector<128xf32>
    %1 = vector.multi_reduction <add>, %0, %cst [1] : vector<128x128xf32> to vector<128xf32>
    %2 = vector.shape_cast %1 : vector<128xf32> to vector<128x1xf32>
    %cst_1 = arith.constant 7.812500e-03 : f32
    %3 = vector.broadcast %cst_1 : f32 to vector<128x1xf32>
    %4 = arith.mulf %2, %3 : vector<128x1xf32>
    %5 = vector.broadcast %4 : vector<128x1xf32> to vector<128x128xf32>
    %6 = arith.subf %0, %5 : vector<128x128xf32>
    %7 = arith.mulf %6, %6 : vector<128x128xf32>
    %cst_2 = arith.constant dense<0.000000e+00> : vector<128xf32>
    %8 = vector.multi_reduction <add>, %7, %cst_2 [1] : vector<128x128xf32> to vector<128xf32>
    %9 = vector.shape_cast %8 : vector<128xf32> to vector<128x1xf32>
    %cst_3 = arith.constant 0.00787401571 : f32
    %10 = vector.broadcast %cst_3 : f32 to vector<128x1xf32>
    %11 = arith.mulf %9, %10 : vector<128x1xf32>
    %12 = math.sqrt %11 : vector<128x1xf32>
    %cst_4 = arith.constant 9.99999997E-7 : f32
    %13 = vector.broadcast %cst_4 : f32 to vector<128x1xf32>
    %14 = arith.addf %12, %13 : vector<128x1xf32>
    %15 = tpu.reciprocal %14 : vector<128x1xf32> -> vector<128x1xf32>
    %c0_5 = arith.constant 0 : index
    %c0_6 = arith.constant 0 : index
    %16 = vector.load %arg2[%c0_5, %c0_6] : memref<1x128xf32, #tpu.memory_space<vmem>>, vector<1x128xf32>
    %17 = vector.broadcast %15 : vector<128x1xf32> to vector<128x128xf32>
    %18 = arith.mulf %6, %17 : vector<128x128xf32>
    %19 = vector.broadcast %16 : vector<1x128xf32> to vector<128x128xf32>
    %20 = arith.mulf %19, %18 : vector<128x128xf32>
    %c0_7 = arith.constant 0 : index
    %c0_8 = arith.constant 0 : index
    %21 = vector.load %arg3[%c0_7, %c0_8] : memref<1x128xf32, #tpu.memory_space<vmem>>, vector<1x128xf32>
    %22 = vector.broadcast %21 : vector<1x128xf32> to vector<128x128xf32>
    %23 = arith.addf %20, %22 : vector<128x128xf32>
    %c0_9 = arith.constant 0 : index
    %c0_10 = arith.constant 0 : index
    %24 = vector.load %arg4[%c0_9, %c0_10] : memref<128x128xf32, #tpu.memory_space<vmem>>, vector<128x128xf32>
    tpu.vector_store %arg4[%c0_9, %c0_10], %23 {strides = array<i32>} : memref<128x128xf32, #tpu.memory_space<vmem>>, vector<128x128xf32>,
    return
  }
  func.func @transform_0(%arg0: i32) -> (i32, i32) {
    %c0_i32 = arith.constant 0 : i32
    %c0_i32_0 = arith.constant 0 : i32
    return %arg0, %c0_i32 : i32, i32
  }
  func.func @transform_1(%arg0: i32) -> (i32, i32) {
    %c0_i32 = arith.constant 0 : i32
    %c0_i32_0 = arith.constant 0 : i32
    %c0_i32_1 = arith.constant 0 : i32
    return %c0_i32, %c0_i32_0 : i32, i32
  }
  func.func @transform_2(%arg0: i32) -> (i32, i32) {
    %c0_i32 = arith.constant 0 : i32
    %c0_i32_0 = arith.constant 0 : i32
    %c0_i32_1 = arith.constant 0 : i32
    return %c0_i32, %c0_i32_0 : i32, i32
  }
  func.func @transform_3(%arg0: i32) -> (i32, i32) {
    %c0_i32 = arith.constant 0 : i32
    %c0_i32_0 = arith.constant 0 : i32
    return %arg0, %c0_i32 : i32, i32
  }
}

</mosaic_0001>

<llo_original>
// kernel: tpu_custom_call.1
$region0: #{tpu_custom_call.1}
  #allocation0 [shape = 'u32[]', space=smem, size = 0x4, offset = 0x4, fixed_abs, tag = 'smem constant byte address 0x4 - core index']
  #allocation1 [shape = 'u32[72,128]{1,0:T(1,128)}', space=vmem, size = 0x9000, scoped, tag = 'internal scratch']
  %s0 = inlined_call_operand.hbm [shape: f32[128,128], index: 0, kind: input, shape index: {}]
  %s1 = inlined_call_operand.hbm [shape: f32[1,128], index: 1, kind: input, shape index: {}]
  %s2 = inlined_call_operand.vmem [shape: f32[1,128], index: 2, kind: input, shape index: {}]
  %s3 = inlined_call_operand.hbm [shape: f32[128,128], index: 3, kind: output, shape index: {}]
  %s4 = sld [smem:[#allocation0]]
  $region30: #{tpu_custom_call.1} parent=0
    _
  %s6 = ssub.s32 1, %s4
  %s7 = scalar_select 0, %s6, %s4
  $region1: #{tpu_custom_call.1} parent=0
    #allocation2 [shape = 'u8[65536]{0}', space=vmem, size = 0x10000, scoped, tag = 'input window, operand 0, single buffered']
    #allocation3 [shape = 's32[1]{0}', space=sflag, size = 0x4, scoped, tag = 'scoped memory for tpu_custom_call.1']
    #allocation4 [shape = 's32[1]{0}', space=sflag, size = 0x4, scoped, tag = 'scoped memory for tpu_custom_call.1']
    #allocation5 [shape = 'u8[512]{0}', space=vmem, size = 0x400, scoped, tag = 'input window, operand 1, single buffered']
    #allocation6 [shape = 's32[1]{0}', space=sflag, size = 0x4, scoped, tag = 'scoped memory for tpu_custom_call.1']
    #allocation7 [shape = 'u8[65536]{0}', space=vmem, size = 0x10000, scoped, tag = 'output window, operand 0, single buffered']
    %8 = vsyncpa [#allocation3], 0
    %9 = vsyncpa [#allocation6], 0
    %10 = vsyncpa [#allocation4], 0
    // Predicated region
    $region2: #{tpu_custom_call.1} parent=1 // pred_check
      _
    $region3: #{tpu_custom_call.1} parent=1 // pred_check_branch
      %12 = sbr.rel (0) target = $region5
    $region4: #{tpu_custom_call.1} parent=1 // pred_region
      %14 = vsyncadd [#allocation3], 0
      %s15 = sshll.u32 %s0, 4
      %s16 = int_to_ptr.hbm [resolvable:$true] %s15
      %s17 = sshll.u32 [#allocation2], 4
      %s18 = int_to_ptr.vmem [resolvable:$true] %s17
      %23 = dma.hbm_to_vmem [thread:$0]  %s16, 2048, %s18, [#allocation3], 128, 128, 8
    $region5: #{tpu_custom_call.1} parent=1 // pred_fallthru
      _
    // Predicated region
    $region6: #{tpu_custom_call.1} parent=1 // pred_check
      _
    $region7: #{tpu_custom_call.1} parent=1 // pred_check_branch
      %25 = sbr.rel (0) target = $region9
    $region8: #{tpu_custom_call.1} parent=1 // pred_region
      %27 = vsyncadd [#allocation6], 0
      %s29 = sshll.u32 %s1, 4
      %s30 = int_to_ptr.hbm [resolvable:$true] %s29
      %s31 = sshll.u32 [#allocation5], 4
      %s32 = int_to_ptr.vmem [resolvable:$true] %s31
      %34 = dma.hbm_to_vmem [thread:$0]  %s30, 16, %s32, [#allocation6]
    $region9: #{tpu_custom_call.1} parent=1 // pred_fallthru
      _
    // Predicated region
    $region10: #{tpu_custom_call.1} parent=1 // pred_check
      _
    $region11: #{tpu_custom_call.1} parent=1 // pred_check_branch
      %36 = sbr.rel (0) target = $region13
    $region12: #{tpu_custom_call.1} parent=1 // pred_region
      _
    $region13: #{tpu_custom_call.1} parent=1 // pred_fallthru
      _
    // Predicated region
    $region14: #{tpu_custom_call.1} parent=1 // pred_check
      _
    $region15: #{tpu_custom_call.1} parent=1 // pred_check_branch
      %38 = sbr.rel (0) target = $region17
    $region16: #{tpu_custom_call.1} parent=1 // pred_region
      %40 = dma.done [#allocation3], 2048
    $region17: #{tpu_custom_call.1} parent=1 // pred_fallthru
      _
    // Predicated region
    $region18: #{tpu_custom_call.1} parent=1 // pred_check
      _
    $region19: #{tpu_custom_call.1} parent=1 // pred_check_branch
      %42 = sbr.rel (0) target = $region21
    $region20: #{tpu_custom_call.1} parent=1 // pred_region
      %44 = dma.done [#allocation6], 16
    $region21: #{tpu_custom_call.1} parent=1 // pred_fallthru
      _
    %v45 = vld [vmem:[#allocation2] sm:$0xff]
    %v46 = vld [vmem:[#allocation2 + $0x8] sm:$0xff]
    %v47 = vld [vmem:[#allocation2 + $0x10] sm:$0xff]
    %v48 = vld [vmem:[#allocation2 + $0x18] sm:$0xff]
    %v49 = vld [vmem:[#allocation2 + $0x20] sm:$0xff]
    %v50 = vld [vmem:[#allocation2 + $0x28] sm:$0xff]
    %v51 = vld [vmem:[#allocation2 + $0x30] sm:$0xff]
    %v52 = vld [vmem:[#allocation2 + $0x38] sm:$0xff]
    %v53 = vld [vmem:[#allocation2 + $0x40] sm:$0xff]
    %v54 = vld [vmem:[#allocation2 + $0x48] sm:$0xff]
    %v55 = vld [vmem:[#allocation2 + $0x50] sm:$0xff]
    %v56 = vld [vmem:[#allocation2 + $0x58] sm:$0xff]
    %v57 = vld [vmem:[#allocation2 + $0x60] sm:$0xff]
    %v58 = vld [vmem:[#allocation2 + $0x68] sm:$0xff]
    %v59 = vld [vmem:[#allocation2 + $0x70] sm:$0xff]
    %v60 = vld [vmem:[#allocation2 + $0x78] sm:$0xff]
    %61 = vadd.xlane.f32.xlu0 %v45
    %v62 = vpop.xlane.xlu0 %61
    %63 = vadd.xlane.f32.xlu0 %v46
    %v64 = vpop.xlane.xlu0 %63
    %65 = vadd.xlane.f32.xlu0 %v47
    %v66 = vpop.xlane.xlu0 %65
    %67 = vadd.xlane.f32.xlu0 %v48
    %v68 = vpop.xlane.xlu0 %67
    %69 = vadd.xlane.f32.xlu0 %v49
    %v70 = vpop.xlane.xlu0 %69
    %71 = vadd.xlane.f32.xlu0 %v50
    %v72 = vpop.xlane.xlu0 %71
    %73 = vadd.xlane.f32.xlu0 %v51
    %v74 = vpop.xlane.xlu0 %73
    %75 = vadd.xlane.f32.xlu0 %v52
    %v76 = vpop.xlane.xlu0 %75
    %77 = vadd.xlane.f32.xlu0 %v53
    %v78 = vpop.xlane.xlu0 %77
    %79 = vadd.xlane.f32.xlu0 %v54
    %v80 = vpop.xlane.xlu0 %79
    %81 = vadd.xlane.f32.xlu0 %v55
    %v82 = vpop.xlane.xlu0 %81
    %83 = vadd.xlane.f32.xlu0 %v56
    %v84 = vpop.xlane.xlu0 %83
    %85 = vadd.xlane.f32.xlu0 %v57
    %v86 = vpop.xlane.xlu0 %85
    %87 = vadd.xlane.f32.xlu0 %v58
    %v88 = vpop.xlane.xlu0 %87
    %89 = vadd.xlane.f32.xlu0 %v59
    %v90 = vpop.xlane.xlu0 %89
    %91 = vadd.xlane.f32.xlu0 %v60
    %v92 = vpop.xlane.xlu0 %91
    %v93 = vmul.f32 %v62, 0.0078125
    %v94 = vmul.f32 %v64, 0.0078125
    %v95 = vmul.f32 %v66, 0.0078125
    %v96 = vmul.f32 %v68, 0.0078125
    %v97 = vmul.f32 %v70, 0.0078125
    %v98 = vmul.f32 %v72, 0.0078125
    %v99 = vmul.f32 %v74, 0.0078125
    %v100 = vmul.f32 %v76, 0.0078125
    %v101 = vmul.f32 %v78, 0.0078125
    %v102 = vmul.f32 %v80, 0.0078125
    %v103 = vmul.f32 %v82, 0.0078125
    %v104 = vmul.f32 %v84, 0.0078125
    %v105 = vmul.f32 %v86, 0.0078125
    %v106 = vmul.f32 %v88, 0.0078125
    %v107 = vmul.f32 %v90, 0.0078125
    %v108 = vmul.f32 %v92, 0.0078125
    %v109 = vsub.f32 %v45, %v93
    %v110 = vsub.f32 %v46, %v94
    %v111 = vsub.f32 %v47, %v95
    %v112 = vsub.f32 %v48, %v96
    %v113 = vsub.f32 %v49, %v97
    %v114 = vsub.f32 %v50, %v98
    %v115 = vsub.f32 %v51, %v99
    %v116 = vsub.f32 %v52, %v100
    %v117 = vsub.f32 %v53, %v101
    %v118 = vsub.f32 %v54, %v102
    %v119 = vsub.f32 %v55, %v103
    %v120 = vsub.f32 %v56, %v104
    %v121 = vsub.f32 %v57, %v105
    %v122 = vsub.f32 %v58, %v106
    %v123 = vsub.f32 %v59, %v107
    %v124 = vsub.f32 %v60, %v108
    %v125 = vmul.f32 %v109, %v109
    %v126 = vmul.f32 %v110, %v110
    %v127 = vmul.f32 %v111, %v111
    %v128 = vmul.f32 %v112, %v112
    %v129 = vmul.f32 %v113, %v113
    %v130 = vmul.f32 %v114, %v114
    %v131 = vmul.f32 %v115, %v115
    %v132 = vmul.f32 %v116, %v116
    %v133 = vmul.f32 %v117, %v117
    %v134 = vmul.f32 %v118, %v118
    %v135 = vmul.f32 %v119, %v119
    %v136 = vmul.f32 %v120, %v120
    %v137 = vmul.f32 %v121, %v121
    %v138 = vmul.f32 %v122, %v122
    %v139 = vmul.f32 %v123, %v123
    %v140 = vmul.f32 %v124, %v124
    %141 = vadd.xlane.f32.xlu0 %v125
    %v142 = vpop.xlane.xlu0 %141
    %143 = vadd.xlane.f32.xlu0 %v126
    %v144 = vpop.xlane.xlu0 %143
    %145 = vadd.xlane.f32.xlu0 %v127
    %v146 = vpop.xlane.xlu0 %145
    %147 = vadd.xlane.f32.xlu0 %v128
    %v148 = vpop.xlane.xlu0 %147
    %149 = vadd.xlane.f32.xlu0 %v129
    %v150 = vpop.xlane.xlu0 %149
    %151 = vadd.xlane.f32.xlu0 %v130
    %v152 = vpop.xlane.xlu0 %151
    %153 = vadd.xlane.f32.xlu0 %v131
    %v154 = vpop.xlane.xlu0 %153
    %155 = vadd.xlane.f32.xlu0 %v132
    %v156 = vpop.xlane.xlu0 %155
    %157 = vadd.xlane.f32.xlu0 %v133
    %v158 = vpop.xlane.xlu0 %157
    %159 = vadd.xlane.f32.xlu0 %v134
    %v160 = vpop.xlane.xlu0 %159
    %161 = vadd.xlane.f32.xlu0 %v135
    %v162 = vpop.xlane.xlu0 %161
    %163 = vadd.xlane.f32.xlu0 %v136
    %v164 = vpop.xlane.xlu0 %163
    %165 = vadd.xlane.f32.xlu0 %v137
    %v166 = vpop.xlane.xlu0 %165
    %167 = vadd.xlane.f32.xlu0 %v138
    %v168 = vpop.xlane.xlu0 %167
    %169 = vadd.xlane.f32.xlu0 %v139
    %v170 = vpop.xlane.xlu0 %169
    %171 = vadd.xlane.f32.xlu0 %v140
    %v172 = vpop.xlane.xlu0 %171
    %v173 = vmul.f32 %v142, 0.007874016
    %v174 = vmul.f32 %v144, 0.007874016
    %v175 = vmul.f32 %v146, 0.007874016
    %v176 = vmul.f32 %v148, 0.007874016
    %v177 = vmul.f32 %v150, 0.007874016
    %v178 = vmul.f32 %v152, 0.007874016
    %v179 = vmul.f32 %v154, 0.007874016
    %v180 = vmul.f32 %v156, 0.007874016
    %v181 = vmul.f32 %v158, 0.007874016
    %v182 = vmul.f32 %v160, 0.007874016
    %v183 = vmul.f32 %v162, 0.007874016
    %v184 = vmul.f32 %v164, 0.007874016
    %v185 = vmul.f32 %v166, 0.007874016
    %v186 = vmul.f32 %v168, 0.007874016
    %v187 = vmul.f32 %v170, 0.007874016
    %v188 = vmul.f32 %v172, 0.007874016
    %v189 = vrsqrt.pop %v173
    %v190 = vmul.f32 %v189, %v173
    %v191 = vmul.f32 %v190, %v189
    %v192 = vmul.f32 0.5, %v191
    %v193 = vsub.f32 1.5, %v192
    %v194 = vmul.f32 %v189, %v193
    %v195 = vmul.f32 %v173, %v194
    %vm196 = vcmp.eq.f32.partialorder %v173, inf
    %v197 = vsel %vm196, %v173, %v195
    %vm198 = vcmp.eq.f32.partialorder %v173, 0.0
    %v199 = vand.u32 %v173, 2147483648
    %v200 = vsel %vm198, %v199, %v197
    %v201 = vrsqrt.pop %v174
    %v202 = vmul.f32 %v201, %v174
    %v203 = vmul.f32 %v202, %v201
    %v204 = vmul.f32 0.5, %v203
    %v205 = vsub.f32 1.5, %v204
    %v206 = vmul.f32 %v201, %v205
    %v207 = vmul.f32 %v174, %v206
    %vm208 = vcmp.eq.f32.partialorder %v174, inf
    %v209 = vsel %vm208, %v174, %v207
    %vm210 = vcmp.eq.f32.partialorder %v174, 0.0
    %v211 = vand.u32 %v174, 2147483648
    %v212 = vsel %vm210, %v211, %v209
    %v213 = vrsqrt.pop %v175
    %v214 = vmul.f32 %v213, %v175
    %v215 = vmul.f32 %v214, %v213
    %v216 = vmul.f32 0.5, %v215
    %v217 = vsub.f32 1.5, %v216
    %v218 = vmul.f32 %v213, %v217
    %v219 = vmul.f32 %v175, %v218
    %vm220 = vcmp.eq.f32.partialorder %v175, inf
    %v221 = vsel %vm220, %v175, %v219
    %vm222 = vcmp.eq.f32.partialorder %v175, 0.0
    %v223 = vand.u32 %v175, 2147483648
    %v224 = vsel %vm222, %v223, %v221
    %v225 = vrsqrt.pop %v176
    %v226 = vmul.f32 %v225, %v176
    %v227 = vmul.f32 %v226, %v225
    %v228 = vmul.f32 0.5, %v227
    %v229 = vsub.f32 1.5, %v228
    %v230 = vmul.f32 %v225, %v229
    %v231 = vmul.f32 %v176, %v230
    %vm232 = vcmp.eq.f32.partialorder %v176, inf
    %v233 = vsel %vm232, %v176, %v231
    %vm234 = vcmp.eq.f32.partialorder %v176, 0.0
    %v235 = vand.u32 %v176, 2147483648
    %v236 = vsel %vm234, %v235, %v233
    %v237 = vrsqrt.pop %v177
    %v238 = vmul.f32 %v237, %v177
    %v239 = vmul.f32 %v238, %v237
    %v240 = vmul.f32 0.5, %v239
    %v241 = vsub.f32 1.5, %v240
    %v242 = vmul.f32 %v237, %v241
    %v243 = vmul.f32 %v177, %v242
    %vm244 = vcmp.eq.f32.partialorder %v177, inf
    %v245 = vsel %vm244, %v177, %v243
    %vm246 = vcmp.eq.f32.partialorder %v177, 0.0
    %v247 = vand.u32 %v177, 2147483648
    %v248 = vsel %vm246, %v247, %v245
    %v249 = vrsqrt.pop %v178
    %v250 = vmul.f32 %v249, %v178
    %v251 = vmul.f32 %v250, %v249
    %v252 = vmul.f32 0.5, %v251
    %v253 = vsub.f32 1.5, %v252
    %v254 = vmul.f32 %v249, %v253
    %v255 = vmul.f32 %v178, %v254
    %vm256 = vcmp.eq.f32.partialorder %v178, inf
    %v257 = vsel %vm256, %v178, %v255
    %vm258 = vcmp.eq.f32.partialorder %v178, 0.0
    %v259 = vand.u32 %v178, 2147483648
    %v260 = vsel %vm258, %v259, %v257
    %v261 = vrsqrt.pop %v179
    %v262 = vmul.f32 %v261, %v179
    %v263 = vmul.f32 %v262, %v261
    %v264 = vmul.f32 0.5, %v263
    %v265 = vsub.f32 1.5, %v264
    %v266 = vmul.f32 %v261, %v265
    %v267 = vmul.f32 %v179, %v266
    %vm268 = vcmp.eq.f32.partialorder %v179, inf
    %v269 = vsel %vm268, %v179, %v267
    %vm270 = vcmp.eq.f32.partialorder %v179, 0.0
    %v271 = vand.u32 %v179, 2147483648
    %v272 = vsel %vm270, %v271, %v269
    %v273 = vrsqrt.pop %v180
    %v274 = vmul.f32 %v273, %v180
    %v275 = vmul.f32 %v274, %v273
    %v276 = vmul.f32 0.5, %v275
    %v277 = vsub.f32 1.5, %v276
    %v278 = vmul.f32 %v273, %v277
    %v279 = vmul.f32 %v180, %v278
    %vm280 = vcmp.eq.f32.partialorder %v180, inf
    %v281 = vsel %vm280, %v180, %v279
    %vm282 = vcmp.eq.f32.partialorder %v180, 0.0
    %v283 = vand.u32 %v180, 2147483648
    %v284 = vsel %vm282, %v283, %v281
    %v285 = vrsqrt.pop %v181
    %v286 = vmul.f32 %v285, %v181
    %v287 = vmul.f32 %v286, %v285
    %v288 = vmul.f32 0.5, %v287
    %v289 = vsub.f32 1.5, %v288
    %v290 = vmul.f32 %v285, %v289
    %v291 = vmul.f32 %v181, %v290
    %vm292 = vcmp.eq.f32.partialorder %v181, inf
    %v293 = vsel %vm292, %v181, %v291
    %vm294 = vcmp.eq.f32.partialorder %v181, 0.0
    %v295 = vand.u32 %v181, 2147483648
    %v296 = vsel %vm294, %v295, %v293
    %v297 = vrsqrt.pop %v182
    %v298 = vmul.f32 %v297, %v182
    %v299 = vmul.f32 %v298, %v297
    %v300 = vmul.f32 0.5, %v299
    %v301 = vsub.f32 1.5, %v300
    %v302 = vmul.f32 %v297, %v301
    %v303 = vmul.f32 %v182, %v302
    %vm304 = vcmp.eq.f32.partialorder %v182, inf
    %v305 = vsel %vm304, %v182, %v303
    %vm306 = vcmp.eq.f32.partialorder %v182, 0.0
    %v307 = vand.u32 %v182, 2147483648
    %v308 = vsel %vm306, %v307, %v305
    %v309 = vrsqrt.pop %v183
    %v310 = vmul.f32 %v309, %v183
    %v311 = vmul.f32 %v310, %v309
    %v312 = vmul.f32 0.5, %v311
    %v313 = vsub.f32 1.5, %v312
    %v314 = vmul.f32 %v309, %v313
    %v315 = vmul.f32 %v183, %v314
    %vm316 = vcmp.eq.f32.partialorder %v183, inf
    %v317 = vsel %vm316, %v183, %v315
    %vm318 = vcmp.eq.f32.partialorder %v183, 0.0
    %v319 = vand.u32 %v183, 2147483648
    %v320 = vsel %vm318, %v319, %v317
    %v321 = vrsqrt.pop %v184
    %v322 = vmul.f32 %v321, %v184
    %v323 = vmul.f32 %v322, %v321
    %v324 = vmul.f32 0.5, %v323
    %v325 = vsub.f32 1.5, %v324
    %v326 = vmul.f32 %v321, %v325
    %v327 = vmul.f32 %v184, %v326
    %vm328 = vcmp.eq.f32.partialorder %v184, inf
    %v329 = vsel %vm328, %v184, %v327
    %vm330 = vcmp.eq.f32.partialorder %v184, 0.0
    %v331 = vand.u32 %v184, 2147483648
    %v332 = vsel %vm330, %v331, %v329
    %v333 = vrsqrt.pop %v185
    %v334 = vmul.f32 %v333, %v185
    %v335 = vmul.f32 %v334, %v333
    %v336 = vmul.f32 0.5, %v335
    %v337 = vsub.f32 1.5, %v336
    %v338 = vmul.f32 %v333, %v337
    %v339 = vmul.f32 %v185, %v338
    %vm340 = vcmp.eq.f32.partialorder %v185, inf
    %v341 = vsel %vm340, %v185, %v339
    %vm342 = vcmp.eq.f32.partialorder %v185, 0.0
    %v343 = vand.u32 %v185, 2147483648
    %v344 = vsel %vm342, %v343, %v341
    %v345 = vrsqrt.pop %v186
    %v346 = vmul.f32 %v345, %v186
    %v347 = vmul.f32 %v346, %v345
    %v348 = vmul.f32 0.5, %v347
    %v349 = vsub.f32 1.5, %v348
    %v350 = vmul.f32 %v345, %v349
    %v351 = vmul.f32 %v186, %v350
    %vm352 = vcmp.eq.f32.partialorder %v186, inf
    %v353 = vsel %vm352, %v186, %v351
    %vm354 = vcmp.eq.f32.partialorder %v186, 0.0
    %v355 = vand.u32 %v186, 2147483648
    %v356 = vsel %vm354, %v355, %v353
    %v357 = vrsqrt.pop %v187
    %v358 = vmul.f32 %v357, %v187
    %v359 = vmul.f32 %v358, %v357
    %v360 = vmul.f32 0.5, %v359
    %v361 = vsub.f32 1.5, %v360
    %v362 = vmul.f32 %v357, %v361
    %v363 = vmul.f32 %v187, %v362
    %vm364 = vcmp.eq.f32.partialorder %v187, inf
    %v365 = vsel %vm364, %v187, %v363
    %vm366 = vcmp.eq.f32.partialorder %v187, 0.0
    %v367 = vand.u32 %v187, 2147483648
    %v368 = vsel %vm366, %v367, %v365
    %v369 = vrsqrt.pop %v188
    %v370 = vmul.f32 %v369, %v188
    %v371 = vmul.f32 %v370, %v369
    %v372 = vmul.f32 0.5, %v371
    %v373 = vsub.f32 1.5, %v372
    %v374 = vmul.f32 %v369, %v373
    %v375 = vmul.f32 %v188, %v374
    %vm376 = vcmp.eq.f32.partialorder %v188, inf
    %v377 = vsel %vm376, %v188, %v375
    %vm378 = vcmp.eq.f32.partialorder %v188, 0.0
    %v379 = vand.u32 %v188, 2147483648
    %v380 = vsel %vm378, %v379, %v377
    %v381 = vadd.f32 %v200, 1e-06
    %v382 = vadd.f32 %v212, 1e-06
    %v383 = vadd.f32 %v224, 1e-06
    %v384 = vadd.f32 %v236, 1e-06
    %v385 = vadd.f32 %v248, 1e-06
    %v386 = vadd.f32 %v260, 1e-06
    %v387 = vadd.f32 %v272, 1e-06
    %v388 = vadd.f32 %v284, 1e-06
    %v389 = vadd.f32 %v296, 1e-06
    %v390 = vadd.f32 %v308, 1e-06
    %v391 = vadd.f32 %v320, 1e-06
    %v392 = vadd.f32 %v332, 1e-06
    %v393 = vadd.f32 %v344, 1e-06
    %v394 = vadd.f32 %v356, 1e-06
    %v395 = vadd.f32 %v368, 1e-06
    %v396 = vadd.f32 %v380, 1e-06
    %v397 = vrcp.pop %v381
    %v398 = vmul.f32 %v381, %v397
    %v399 = vsub.f32 1.0, %v398
    %v400 = vmul.f32 %v397, %v399
    %v401 = vadd.f32 %v397, %v400
    %vm402 = vweird.f32 %v381
    %vm403 = vweird.f32 %v397
    %vm404 = vmor %vm402, %vm403
    %v405 = vsel %vm404, %v397, %v401
    %v406 = vand.u32 2147483647, %v381
    %vm407 = vcmp.eq.f32.partialorder %v406, 8.507059e+37
    %v408 = vand.u32 %v381, 2147483648
    %v409 = vor.u32 1.1754944e-38, %v408
    %v410 = vsel %vm407, %v409, %v405
    %v411 = vrcp.pop %v382
    %v412 = vmul.f32 %v382, %v411
    %v413 = vsub.f32 1.0, %v412
    %v414 = vmul.f32 %v411, %v413
    %v415 = vadd.f32 %v411, %v414
    %vm416 = vweird.f32 %v382
    %vm417 = vweird.f32 %v411
    %vm418 = vmor %vm416, %vm417
    %v419 = vsel %vm418, %v411, %v415
    %v420 = vand.u32 2147483647, %v382
    %vm421 = vcmp.eq.f32.partialorder %v420, 8.507059e+37
    %v422 = vand.u32 %v382, 2147483648
    %v423 = vor.u32 1.1754944e-38, %v422
    %v424 = vsel %vm421, %v423, %v419
    %v425 = vrcp.pop %v383
    %v426 = vmul.f32 %v383, %v425
    %v427 = vsub.f32 1.0, %v426
    %v428 = vmul.f32 %v425, %v427
    %v429 = vadd.f32 %v425, %v428
    %vm430 = vweird.f32 %v383
    %vm431 = vweird.f32 %v425
    %vm432 = vmor %vm430, %vm431
    %v433 = vsel %vm432, %v425, %v429
    %v434 = vand.u32 2147483647, %v383
    %vm435 = vcmp.eq.f32.partialorder %v434, 8.507059e+37
    %v436 = vand.u32 %v383, 2147483648
    %v437 = vor.u32 1.1754944e-38, %v436
    %v438 = vsel %vm435, %v437, %v433
    %v439 = vrcp.pop %v384
    %v440 = vmul.f32 %v384, %v439
    %v441 = vsub.f32 1.0, %v440
    %v442 = vmul.f32 %v439, %v441
    %v443 = vadd.f32 %v439, %v442
    %vm444 = vweird.f32 %v384
    %vm445 = vweird.f32 %v439
    %vm446 = vmor %vm444, %vm445
    %v447 = vsel %vm446, %v439, %v443
    %v448 = vand.u32 2147483647, %v384
    %vm449 = vcmp.eq.f32.partialorder %v448, 8.507059e+37
    %v450 = vand.u32 %v384, 2147483648
    %v451 = vor.u32 1.1754944e-38, %v450
    %v452 = vsel %vm449, %v451, %v447
    %v453 = vrcp.pop %v385
    %v454 = vmul.f32 %v385, %v453
    %v455 = vsub.f32 1.0, %v454
    %v456 = vmul.f32 %v453, %v455
    %v457 = vadd.f32 %v453, %v456
    %vm458 = vweird.f32 %v385
    %vm459 = vweird.f32 %v453
    %vm460 = vmor %vm458, %vm459
    %v461 = vsel %vm460, %v453, %v457
    %v462 = vand.u32 2147483647, %v385
    %vm463 = vcmp.eq.f32.partialorder %v462, 8.507059e+37
    %v464 = vand.u32 %v385, 2147483648
    %v465 = vor.u32 1.1754944e-38, %v464
    %v466 = vsel %vm463, %v465, %v461
    %v467 = vrcp.pop %v386
    %v468 = vmul.f32 %v386, %v467
    %v469 = vsub.f32 1.0, %v468
    %v470 = vmul.f32 %v467, %v469
    %v471 = vadd.f32 %v467, %v470
    %vm472 = vweird.f32 %v386
    %vm473 = vweird.f32 %v467
    %vm474 = vmor %vm472, %vm473
    %v475 = vsel %vm474, %v467, %v471
    %v476 = vand.u32 2147483647, %v386
    %vm477 = vcmp.eq.f32.partialorder %v476, 8.507059e+37
    %v478 = vand.u32 %v386, 2147483648
    %v479 = vor.u32 1.1754944e-38, %v478
    %v480 = vsel %vm477, %v479, %v475
    %v481 = vrcp.pop %v387
    %v482 = vmul.f32 %v387, %v481
    %v483 = vsub.f32 1.0, %v482
    %v484 = vmul.f32 %v481, %v483
    %v485 = vadd.f32 %v481, %v484
    %vm486 = vweird.f32 %v387
    %vm487 = vweird.f32 %v481
    %vm488 = vmor %vm486, %vm487
    %v489 = vsel %vm488, %v481, %v485
    %v490 = vand.u32 2147483647, %v387
    %vm491 = vcmp.eq.f32.partialorder %v490, 8.507059e+37
    %v492 = vand.u32 %v387, 2147483648
    %v493 = vor.u32 1.1754944e-38, %v492
    %v494 = vsel %vm491, %v493, %v489
    %v495 = vrcp.pop %v388
    %v496 = vmul.f32 %v388, %v495
    %v497 = vsub.f32 1.0, %v496
    %v498 = vmul.f32 %v495, %v497
    %v499 = vadd.f32 %v495, %v498
    %vm500 = vweird.f32 %v388
    %vm501 = vweird.f32 %v495
    %vm502 = vmor %vm500, %vm501
    %v503 = vsel %vm502, %v495, %v499
    %v504 = vand.u32 2147483647, %v388
    %vm505 = vcmp.eq.f32.partialorder %v504, 8.507059e+37
    %v506 = vand.u32 %v388, 2147483648
    %v507 = vor.u32 1.1754944e-38, %v506
    %v508 = vsel %vm505, %v507, %v503
    %v509 = vrcp.pop %v389
    %v510 = vmul.f32 %v389, %v509
    %v511 = vsub.f32 1.0, %v510
    %v512 = vmul.f32 %v509, %v511
    %v513 = vadd.f32 %v509, %v512
    %vm514 = vweird.f32 %v389
    %vm515 = vweird.f32 %v509
    %vm516 = vmor %vm514, %vm515
    %v517 = vsel %vm516, %v509, %v513
    %v518 = vand.u32 2147483647, %v389
    %vm519 = vcmp.eq.f32.partialorder %v518, 8.507059e+37
    %v520 = vand.u32 %v389, 2147483648
    %v521 = vor.u32 1.1754944e-38, %v520
    %v522 = vsel %vm519, %v521, %v517
    %v523 = vrcp.pop %v390
    %v524 = vmul.f32 %v390, %v523
    %v525 = vsub.f32 1.0, %v524
    %v526 = vmul.f32 %v523, %v525
    %v527 = vadd.f32 %v523, %v526
    %vm528 = vweird.f32 %v390
    %vm529 = vweird.f32 %v523
    %vm530 = vmor %vm528, %vm529
    %v531 = vsel %vm530, %v523, %v527
    %v532 = vand.u32 2147483647, %v390
    %vm533 = vcmp.eq.f32.partialorder %v532, 8.507059e+37
    %v534 = vand.u32 %v390, 2147483648
    %v535 = vor.u32 1.1754944e-38, %v534
    %v536 = vsel %vm533, %v535, %v531
    %v537 = vrcp.pop %v391
    %v538 = vmul.f32 %v391, %v537
    %v539 = vsub.f32 1.0, %v538
    %v540 = vmul.f32 %v537, %v539
    %v541 = vadd.f32 %v537, %v540
    %vm542 = vweird.f32 %v391
    %vm543 = vweird.f32 %v537
    %vm544 = vmor %vm542, %vm543
    %v545 = vsel %vm544, %v537, %v541
    %v546 = vand.u32 2147483647, %v391
    %vm547 = vcmp.eq.f32.partialorder %v546, 8.507059e+37
    %v548 = vand.u32 %v391, 2147483648
    %v549 = vor.u32 1.1754944e-38, %v548
    %v550 = vsel %vm547, %v549, %v545
    %v551 = vrcp.pop %v392
    %v552 = vmul.f32 %v392, %v551
    %v553 = vsub.f32 1.0, %v552
    %v554 = vmul.f32 %v551, %v553
    %v555 = vadd.f32 %v551, %v554
    %vm556 = vweird.f32 %v392
    %vm557 = vweird.f32 %v551
    %vm558 = vmor %vm556, %vm557
    %v559 = vsel %vm558, %v551, %v555
    %v560 = vand.u32 2147483647, %v392
    %vm561 = vcmp.eq.f32.partialorder %v560, 8.507059e+37
    %v562 = vand.u32 %v392, 2147483648
    %v563 = vor.u32 1.1754944e-38, %v562
    %v564 = vsel %vm561, %v563, %v559
    %v565 = vrcp.pop %v393
    %v566 = vmul.f32 %v393, %v565
    %v567 = vsub.f32 1.0, %v566
    %v568 = vmul.f32 %v565, %v567
    %v569 = vadd.f32 %v565, %v568
    %vm570 = vweird.f32 %v393
    %vm571 = vweird.f32 %v565
    %vm572 = vmor %vm570, %vm571
    %v573 = vsel %vm572, %v565, %v569
    %v574 = vand.u32 2147483647, %v393
    %vm575 = vcmp.eq.f32.partialorder %v574, 8.507059e+37
    %v576 = vand.u32 %v393, 2147483648
    %v577 = vor.u32 1.1754944e-38, %v576
    %v578 = vsel %vm575, %v577, %v573
    %v579 = vrcp.pop %v394
    %v580 = vmul.f32 %v394, %v579
    %v581 = vsub.f32 1.0, %v580
    %v582 = vmul.f32 %v579, %v581
    %v583 = vadd.f32 %v579, %v582
    %vm584 = vweird.f32 %v394
    %vm585 = vweird.f32 %v579
    %vm586 = vmor %vm584, %vm585
    %v587 = vsel %vm586, %v579, %v583
    %v588 = vand.u32 2147483647, %v394
    %vm589 = vcmp.eq.f32.partialorder %v588, 8.507059e+37
    %v590 = vand.u32 %v394, 2147483648
    %v591 = vor.u32 1.1754944e-38, %v590
    %v592 = vsel %vm589, %v591, %v587
    %v593 = vrcp.pop %v395
    %v594 = vmul.f32 %v395, %v593
    %v595 = vsub.f32 1.0, %v594
    %v596 = vmul.f32 %v593, %v595
    %v597 = vadd.f32 %v593, %v596
    %vm598 = vweird.f32 %v395
    %vm599 = vweird.f32 %v593
    %vm600 = vmor %vm598, %vm599
    %v601 = vsel %vm600, %v593, %v597
    %v602 = vand.u32 2147483647, %v395
    %vm603 = vcmp.eq.f32.partialorder %v602, 8.507059e+37
    %v604 = vand.u32 %v395, 2147483648
    %v605 = vor.u32 1.1754944e-38, %v604
    %v606 = vsel %vm603, %v605, %v601
    %v607 = vrcp.pop %v396
    %v608 = vmul.f32 %v396, %v607
    %v609 = vsub.f32 1.0, %v608
    %v610 = vmul.f32 %v607, %v609
    %v611 = vadd.f32 %v607, %v610
    %vm612 = vweird.f32 %v396
    %vm613 = vweird.f32 %v607
    %vm614 = vmor %vm612, %vm613
    %v615 = vsel %vm614, %v607, %v611
    %v616 = vand.u32 2147483647, %v396
    %vm617 = vcmp.eq.f32.partialorder %v616, 8.507059e+37
    %v618 = vand.u32 %v396, 2147483648
    %v619 = vor.u32 1.1754944e-38, %v618
    %v620 = vsel %vm617, %v619, %v615
    %v621 = vld [vmem:[#allocation5] sm:$0x1]
    %v622 = vmul.f32 %v109, %v410
    %v623 = vmul.f32 %v110, %v424
    %v624 = vmul.f32 %v111, %v438
    %v625 = vmul.f32 %v112, %v452
    %v626 = vmul.f32 %v113, %v466
    %v627 = vmul.f32 %v114, %v480
    %v628 = vmul.f32 %v115, %v494
    %v629 = vmul.f32 %v116, %v508
    %v630 = vmul.f32 %v117, %v522
    %v631 = vmul.f32 %v118, %v536
    %v632 = vmul.f32 %v119, %v550
    %v633 = vmul.f32 %v120, %v564
    %v634 = vmul.f32 %v121, %v578
    %v635 = vmul.f32 %v122, %v592
    %v636 = vmul.f32 %v123, %v606
    %v637 = vmul.f32 %v124, %v620
    %v639 = vperm.slane %v621, 0
    %v641 = vmul.f32 %v639, %v622
    %v642 = vmul.f32 %v639, %v623
    %v643 = vmul.f32 %v639, %v624
    %v644 = vmul.f32 %v639, %v625
    %v645 = vmul.f32 %v639, %v626
    %v646 = vmul.f32 %v639, %v627
    %v647 = vmul.f32 %v639, %v628
    %v648 = vmul.f32 %v639, %v629
    %v649 = vmul.f32 %v639, %v630
    %v650 = vmul.f32 %v639, %v631
    %v651 = vmul.f32 %v639, %v632
    %v652 = vmul.f32 %v639, %v633
    %v653 = vmul.f32 %v639, %v634
    %v654 = vmul.f32 %v639, %v635
    %v655 = vmul.f32 %v639, %v636
    %v656 = vmul.f32 %v639, %v637
    %v657 = vld [vmem:[%s2] sm:$0x1]
    %v659 = vperm.slane %v657, 0
    %v661 = vadd.f32 %v641, %v659
    %v662 = vadd.f32 %v642, %v659
    %v663 = vadd.f32 %v643, %v659
    %v664 = vadd.f32 %v644, %v659
    %v665 = vadd.f32 %v645, %v659
    %v666 = vadd.f32 %v646, %v659
    %v667 = vadd.f32 %v647, %v659
    %v668 = vadd.f32 %v648, %v659
    %v669 = vadd.f32 %v649, %v659
    %v670 = vadd.f32 %v650, %v659
    %v671 = vadd.f32 %v651, %v659
    %v672 = vadd.f32 %v652, %v659
    %v673 = vadd.f32 %v653, %v659
    %v674 = vadd.f32 %v654, %v659
    %v675 = vadd.f32 %v655, %v659
    %v676 = vadd.f32 %v656, %v659
    %677 = vst [vmem:[#allocation7] sm:$0xff] %v661
    %678 = vst [vmem:[#allocation7 + $0x8] sm:$0xff] %v662
    %679 = vst [vmem:[#allocation7 + $0x10] sm:$0xff] %v663
    %680 = vst [vmem:[#allocation7 + $0x18] sm:$0xff] %v664
    %681 = vst [vmem:[#allocation7 + $0x20] sm:$0xff] %v665
    %682 = vst [vmem:[#allocation7 + $0x28] sm:$0xff] %v666
    %683 = vst [vmem:[#allocation7 + $0x30] sm:$0xff] %v667
    %684 = vst [vmem:[#allocation7 + $0x38] sm:$0xff] %v668
    %685 = vst [vmem:[#allocation7 + $0x40] sm:$0xff] %v669
    %686 = vst [vmem:[#allocation7 + $0x48] sm:$0xff] %v670
    %687 = vst [vmem:[#allocation7 + $0x50] sm:$0xff] %v671
    %688 = vst [vmem:[#allocation7 + $0x58] sm:$0xff] %v672
    %689 = vst [vmem:[#allocation7 + $0x60] sm:$0xff] %v673
    %690 = vst [vmem:[#allocation7 + $0x68] sm:$0xff] %v674
    %691 = vst [vmem:[#allocation7 + $0x70] sm:$0xff] %v675
    %692 = vst [vmem:[#allocation7 + $0x78] sm:$0xff] %v676
    // Predicated region
    $region22: #{tpu_custom_call.1} parent=1 // pred_check
      _
    $region23: #{tpu_custom_call.1} parent=1 // pred_check_branch
      %694 = sbr.rel (0) target = $region25
    $region24: #{tpu_custom_call.1} parent=1 // pred_region
      %696 = vsyncadd [#allocation4], 0
      %s697 = sshll.u32 [#allocation7], 4
      %s698 = int_to_ptr.vmem [resolvable:$true] %s697
      %s699 = sshll.u32 %s3, 4
      %s700 = int_to_ptr.hbm [resolvable:$true] %s699
      %705 = dma.vmem_to_hbm [thread:$0]  %s698, 2048, %s700, [#allocation4], 128, 128, 8
    $region25: #{tpu_custom_call.1} parent=1 // pred_fallthru
      _
    // Predicated region
    $region26: #{tpu_custom_call.1} parent=1 // pred_check
      _
    $region27: #{tpu_custom_call.1} parent=1 // pred_check_branch
      %707 = sbr.rel (0) target = $region29
    $region28: #{tpu_custom_call.1} parent=1 // pred_region
      %709 = dma.done [#allocation4], 2048
    $region29: #{tpu_custom_call.1} parent=1 // pred_fallthru
      _
    %710 = vsyncpa [#allocation3], 1
    %711 = vsyncpa [#allocation6], 1
    %712 = vsyncpa [#allocation4], 1

</llo_original>
